<compile_context>
chip_gen: v5e
topology: v5e:2x2
jax: 0.10.0
libtpu: 0.0.40
codegen_flags: <defaults>
</compile_context>

<pallas_src>
import jax
import jax.numpy as jnp
from jax.experimental import pallas as pl
from jax.experimental.pallas import tpu as pltpu

F = 13  # number of input features (module indexes up to col 12)

# Feature-major slab row order (gated rows first, blink last):
#   rows 0..3 : sim features in module order  x[:, [1, 2, 0, 3]]
#   row  4    : context feature               x[:, 12]
#   row  5    : blink score                   x[:, 10]
ROW_COLS = (1, 2, 0, 3, 12, 10)
FU = len(ROW_COLS)  # = 6

MAX_TN = 131072          # max lanes per grid step (multiple of 128)
MIN_SPLIT_LANES = 40960  # split across TCs only if each step moves >= ~1 MiB


def _context_lnn_blink_kernel(s_ref, thr_ref, wor_ref, xT_ref, o_ref):
    """s_ref:   (5,)   f32 SMEM  [1 - or_beta,
                                  and_beta - sum(and_w),
                                  and_w[0] (blink), and_w[1] (disj), and_w[2] (ctx)]
       thr_ref: (FU,1) f32 VMEM  pre-sigmoided per-row gate thresholds (row 5 unused)
       wor_ref: (FU,1) f32 VMEM  OR weights on rows 0..3, zeros elsewhere
       xT_ref:  (FU,TN) f32 VMEM feature-major input slab
       o_ref:   (1, TN) f32 VMEM
    """
    x = xT_ref[...]                                              # (FU, TN)
    # Dense gate over the whole slab: ONE sigmoid per 128 batch lanes.
    # (blink row 5 gets a dummy gate which is never used.)
    g = x * jax.nn.sigmoid(x - thr_ref[...])                     # (FU, TN)

    # Weighted Lukasiewicz OR over the 4 sim rows: sublane-weighted reduce.
    wsum = jnp.sum(wor_ref[...] * g, axis=0, keepdims=True)      # (1, TN)
    disj = jnp.clip(s_ref[0] + wsum, 0.0, 1.0)                   # 1 - beta + sum

    blink = xT_ref[5:6, :]                                       # raw blink row
    ctxg = g[4:5, :]                                             # gated context row

    # Weighted Lukasiewicz AND over [blink, disj, ctx_gated], constants folded:
    #   beta - sum(w) + w0*blink + w1*disj + w2*ctx
    pre = s_ref[1] + s_ref[2] * blink + s_ref[3] * disj + s_ref[4] * ctxg
    o_ref[...] = jnp.clip(pre, 0.0, 1.0)


def make_params():
    """Deterministic parameters matching the module's __init__ shapes."""
    return {
        "threshold":         jnp.array([0.2, 0.2, 0.2, 0.2], jnp.float32),  # (4,)
        "context_threshold": jnp.array([0.25], jnp.float32),                # (1,)
        "or_weights":        jnp.ones((4,), jnp.float32),                   # OR arity 4
        "or_beta":           jnp.ones((1,), jnp.float32),
        "and_weights":       jnp.ones((3,), jnp.float32),                   # AND arity 3
        "and_beta":          jnp.ones((1,), jnp.float32),
    }


def _num_tensorcores():
    """Best-effort TensorCore-per-chip count (v7x=2, v5e/v6e=1)."""
    try:
        info = pltpu.get_tpu_info()
        for name in ("num_cores", "cores_per_chip", "num_tensorcores"):
            v = getattr(info, name, None)
            if v:
                return max(1, int(v))
    except Exception:
        pass
    try:
        return max(1, int(getattr(jax.local_devices()[0], "num_cores", 1)))
    except Exception:
        return 1


def _pick_tile(n, n_cores):
    """Largest lane-dense tile; split across TCs only when each half still
    amortizes the ~0.35us per-step pipeline overhead (>= ~1 MiB/step)."""
    n128 = pl.cdiv(max(n, 1), 128) * 128
    if n_cores >= 2 and n128 >= n_cores * MIN_SPLIT_LANES:
        tn = pl.cdiv(pl.cdiv(n128, n_cores), 128) * 128
    else:
        tn = n128
    return max(128, min(MAX_TN, tn))


def context_lnn_blink(x, params):
    """x: (N, 13) f32 -> (N, 1) f32, matching the PyTorch forward."""
    n, f = x.shape
    assert f == F, f"expected {F} features, got {f}"
    xf = x.astype(jnp.float32)

    # Single fused wrapper pass: static column slices + stack -> (FU, N)
    # feature-major slab (batch on the lane axis).  No dynamic gather, no pad.
    x6t = jnp.stack([xf[:, c] for c in ROW_COLS], axis=0)        # (FU, n)

    # Hoisted parameter math (all tiny, done once per call).
    thr_col = jnp.concatenate([
        jax.nn.sigmoid(params["threshold"]),                     # rows 0..3
        jax.nn.sigmoid(params["context_threshold"]),             # row 4
        jnp.zeros((1,), jnp.float32),                            # row 5 (blink, unused)
    ]).reshape(FU, 1).astype(jnp.float32)

    wor_col = jnp.concatenate([
        params["or_weights"],                                    # rows 0..3
        jnp.zeros((2,), jnp.float32),                            # rows 4, 5
    ]).reshape(FU, 1).astype(jnp.float32)

    aw = params["and_weights"]
    s = jnp.concatenate([
        1.0 - params["or_beta"],                                 # OR bias
        params["and_beta"] - jnp.sum(aw, keepdims=True),         # AND bias (folded)
        aw,                                                      # and_w0..2
    ]).astype(jnp.float32)                                       # (5,)

    tn = _pick_tile(n, _num_tensorcores())
    n_tiles = pl.cdiv(n, tn)

    out_row = pl.pallas_call(
        _context_lnn_blink_kernel,
        out_shape=jax.ShapeDtypeStruct((1, n), jnp.float32),
        grid_spec=pltpu.PrefetchScalarGridSpec(
            num_scalar_prefetch=0,
            grid=(n_tiles,),
            in_specs=[
                pl.BlockSpec(memory_space=pltpu.MemorySpace.SMEM),   # packed scalars
                pl.BlockSpec((FU, 1), lambda i: (0, 0)),             # thresholds
                pl.BlockSpec((FU, 1), lambda i: (0, 0)),             # OR weights
                pl.BlockSpec((FU, tn), lambda i: (0, i)),            # feature slab
            ],
            out_specs=pl.BlockSpec((1, tn), lambda i: (0, i)),
        ),
        compiler_params=pltpu.CompilerParams(
            dimension_semantics=("parallel",)),
    )(s, thr_col, wor_col, x6t)

    # (1, N) row is contiguous; reshape to the PyTorch (N, 1) convention is
    # metadata-only.  Keep the lane-dense out_spec (unmasked vst).
    return out_row.reshape(n, 1).astype(x.dtype)


def reference(x, p):
    """Pure-JAX re-implementation of the PyTorch forward (for validation)."""
    sig = jax.nn.sigmoid
    blink = x[:, 10:11]
    ctx = x[:, 12:13]
    ctx_ = ctx * sig(ctx - sig(p["context_threshold"]))
    sim = x[:, jnp.array([1, 2, 0, 3])]
    sim_ = sim * sig(sim - sig(p["threshold"]))
    disj = jnp.clip(
        1.0 - p["or_beta"] + jnp.sum(p["or_weights"] * sim_, axis=1, keepdims=True),
        0.0, 1.0)
    cat = jnp.concatenate([blink, disj, ctx_], axis=1)
    yhat = jnp.clip(
        p["and_beta"] - jnp.sum(p["and_weights"] * (1.0 - cat), axis=1, keepdims=True),
        0.0, 1.0)
    return yhat


if __name__ == "__main__":
    key = jax.random.PRNGKey(0)
    n = 300  # deliberately not a multiple of 128 to exercise the partial tail
    x = jax.random.uniform(key, (n, F), dtype=jnp.float32)

    params = make_params()

    yhat = context_lnn_blink(x, params)
    yhat = jax.block_until_ready(yhat)

    y_ref = reference(x, params)
    assert yhat.shape == (n, 1), yhat.shape
    assert jnp.allclose(yhat, y_ref, atol=1e-5, rtol=1e-5), (
        f"max abs err = {jnp.max(jnp.abs(yhat - y_ref))}")

    print("KERNEL_OK")
</pallas_src>

<mosaic_0001>
module attributes {stable_mosaic.version = 11 : i64} {
  func.func @_context_lnn_blink_kernel(%arg0: i32, %arg1: memref<5xf32, #tpu.memory_space<smem>>, %arg2: memref<6x1xf32, #tpu.memory_space<vmem>>, %arg3: memref<6x1xf32, #tpu.memory_space<vmem>>, %arg4: memref<6x384xf32, #tpu.memory_space<vmem>>, %arg5: memref<1x384xf32, #tpu.memory_space<vmem>>) attributes {dimension_semantics = [#tpu.dimension_semantics<parallel>], iteration_bounds = array<i64: 1>, scalar_prefetch = 0 : i64, scratch_operands = 0 : i64, tpu.core_type = #tpu.core_type<tc>, window_params = [{transform_indices = @transform_0, window_bounds = array<i64: 5>}, {pipeline_mode = #tpu.pipeline_mode<synchronous>, transform_indices = @transform_1, window_bounds = array<i64: 6, 1>}, {pipeline_mode = #tpu.pipeline_mode<synchronous>, transform_indices = @transform_2, window_bounds = array<i64: 6, 1>}, {transform_indices = @transform_3, window_bounds = array<i64: 6, 384>}, {transform_indices = @transform_4, window_bounds = array<i64: 1, 384>}]} {
    %c0 = arith.constant 0 : index
    %c0_0 = arith.constant 0 : index
    %0 = vector.load %arg4[%c0, %c0_0] : memref<6x384xf32, #tpu.memory_space<vmem>>, vector<6x384xf32>
    %c0_1 = arith.constant 0 : index
    %c0_2 = arith.constant 0 : index
    %1 = vector.load %arg2[%c0_1, %c0_2] : memref<6x1xf32, #tpu.memory_space<vmem>>, vector<6x1xf32>
    %2 = vector.broadcast %1 : vector<6x1xf32> to vector<6x384xf32>
    %3 = arith.subf %0, %2 : vector<6x384xf32>
    %4 = arith.negf %3 : vector<6x384xf32>
    %5 = math.exp %4 : vector<6x384xf32>
    %cst = arith.constant 1.000000e+00 : f32
    %6 = vector.broadcast %cst : f32 to vector<6x384xf32>
    %7 = arith.addf %6, %5 : vector<6x384xf32>
    %8 = arith.divf %6, %7 : vector<6x384xf32>
    %9 = arith.mulf %0, %8 : vector<6x384xf32>
    %c0_3 = arith.constant 0 : index
    %c0_4 = arith.constant 0 : index
    %10 = vector.load %arg3[%c0_3, %c0_4] : memref<6x1xf32, #tpu.memory_space<vmem>>, vector<6x1xf32>
    %11 = vector.broadcast %10 : vector<6x1xf32> to vector<6x384xf32>
    %12 = arith.mulf %11, %9 : vector<6x384xf32>
    %cst_5 = arith.constant dense<0.000000e+00> : vector<384xf32>
    %13 = vector.multi_reduction <add>, %12, %cst_5 [0] : vector<6x384xf32> to vector<384xf32>
    %14 = vector.shape_cast %13 : vector<384xf32> to vector<1x384xf32>
    %c0_6 = arith.constant 0 : index
    %15 = memref.load %arg1[%c0_6] : memref<5xf32, #tpu.memory_space<smem>>
    %16 = vector.broadcast %15 : f32 to vector<1x384xf32>
    %17 = arith.addf %16, %14 : vector<1x384xf32>
    %cst_7 = arith.constant 0.000000e+00 : f32
    %cst_8 = arith.constant 1.000000e+00 : f32
    %18 = vector.broadcast %cst_7 : f32 to vector<1x384xf32>
    %19 = arith.maximumf %18, %17 : vector<1x384xf32>
    %20 = vector.broadcast %cst_8 : f32 to vector<1x384xf32>
    %21 = arith.minimumf %20, %19 : vector<1x384xf32>
    %c5 = arith.constant 5 : index
    %c0_9 = arith.constant 0 : index
    %22 = vector.load %arg4[%c5, %c0_9] : memref<6x384xf32, #tpu.memory_space<vmem>>, vector<1x384xf32>
    %23 = vector.extract_strided_slice %9 {offsets = [4, 0], sizes = [1, 384], strides = [1, 1]} : vector<6x384xf32> to vector<1x384xf32>
    %c1 = arith.constant 1 : index
    %24 = memref.load %arg1[%c1] : memref<5xf32, #tpu.memory_space<smem>>
    %c2 = arith.constant 2 : index
    %25 = memref.load %arg1[%c2] : memref<5xf32, #tpu.memory_space<smem>>
    %26 = vector.broadcast %25 : f32 to vector<1x384xf32>
    %27 = arith.mulf %26, %22 : vector<1x384xf32>
    %28 = vector.broadcast %24 : f32 to vector<1x384xf32>
    %29 = arith.addf %28, %27 : vector<1x384xf32>
    %c3 = arith.constant 3 : index
    %30 = memref.load %arg1[%c3] : memref<5xf32, #tpu.memory_space<smem>>
    %31 = vector.broadcast %30 : f32 to vector<1x384xf32>
    %32 = arith.mulf %31, %21 : vector<1x384xf32>
    %33 = arith.addf %29, %32 : vector<1x384xf32>
    %c4 = arith.constant 4 : index
    %34 = memref.load %arg1[%c4] : memref<5xf32, #tpu.memory_space<smem>>
    %35 = vector.broadcast %34 : f32 to vector<1x384xf32>
    %36 = arith.mulf %35, %23 : vector<1x384xf32>
    %37 = arith.addf %33, %36 : vector<1x384xf32>
    %cst_10 = arith.constant 0.000000e+00 : f32
    %cst_11 = arith.constant 1.000000e+00 : f32
    %38 = vector.broadcast %cst_10 : f32 to vector<1x384xf32>
    %39 = arith.maximumf %38, %37 : vector<1x384xf32>
    %40 = vector.broadcast %cst_11 : f32 to vector<1x384xf32>
    %41 = arith.minimumf %40, %39 : vector<1x384xf32>
    %c0_12 = arith.constant 0 : index
    %c0_13 = arith.constant 0 : index
    %42 = vector.load %arg5[%c0_12, %c0_13] : memref<1x384xf32, #tpu.memory_space<vmem>>, vector<1x384xf32>
    tpu.vector_store %arg5[%c0_12, %c0_13], %41 {strides = array<i32>} : memref<1x384xf32, #tpu.memory_space<vmem>>, vector<1x384xf32>,
    return
  }
  func.func @transform_0(%arg0: i32) -> i32 {
    %c0_i32 = arith.constant 0 : i32
    %c0_i32_0 = arith.constant 0 : i32
    return %c0_i32 : i32
  }
  func.func @transform_1(%arg0: i32) -> (i32, i32) {
    %c0_i32 = arith.constant 0 : i32
    %c0_i32_0 = arith.constant 0 : i32
    %c0_i32_1 = arith.constant 0 : i32
    return %c0_i32, %c0_i32_0 : i32, i32
  }
  func.func @transform_2(%arg0: i32) -> (i32, i32) {
    %c0_i32 = arith.constant 0 : i32
    %c0_i32_0 = arith.constant 0 : i32
    %c0_i32_1 = arith.constant 0 : i32
    return %c0_i32, %c0_i32_0 : i32, i32
  }
  func.func @transform_3(%arg0: i32) -> (i32, i32) {
    %c0_i32 = arith.constant 0 : i32
    %c0_i32_0 = arith.constant 0 : i32
    return %c0_i32, %arg0 : i32, i32
  }
  func.func @transform_4(%arg0: i32) -> (i32, i32) {
    %c0_i32 = arith.constant 0 : i32
    %c0_i32_0 = arith.constant 0 : i32
    return %c0_i32, %arg0 : i32, i32
  }
}

</mosaic_0001>

<llo_original>
// kernel: tpu_custom_call.1
$region0: #{tpu_custom_call.1}
  #allocation0 [shape = 'u32[]', space=smem, size = 0x4, offset = 0x4, fixed_abs, tag = 'smem constant byte address 0x4 - core index']
  #allocation1 [shape = 'u32[72,128]{1,0:T(1,128)}', space=vmem, size = 0x9000, scoped, tag = 'internal scratch']
  %s0 = inlined_call_operand.vmem [shape: f32[5], index: 0, kind: input, shape index: {}]
  %s1 = inlined_call_operand.vmem [shape: f32[6,1], index: 1, kind: input, shape index: {}]
  %s2 = inlined_call_operand.vmem [shape: f32[6,1], index: 2, kind: input, shape index: {}]
  %s3 = inlined_call_operand.hbm [shape: f32[6,300], index: 3, kind: input, shape index: {}]
  %s4 = inlined_call_operand.hbm [shape: f32[1,300], index: 4, kind: output, shape index: {}]
  %s5 = sld [smem:[#allocation0]]
  $region34: #{tpu_custom_call.1} parent=0
    _
  %s7 = ssub.s32 1, %s5
  %s8 = scalar_select 0, %s7, %s5
  $region1: #{tpu_custom_call.1} parent=0
    #allocation2 [shape = 'u8[512]{0}', space=smem, size = 0x200, scoped, tag = 'input window, operand 0, single buffered']
    #allocation3 [shape = 's32[1]{0}', space=sflag, size = 0x4, scoped, tag = 'scoped memory for tpu_custom_call.1']
    #allocation4 [shape = 's32[1]{0}', space=sflag, size = 0x4, scoped, tag = 'scoped memory for tpu_custom_call.1']
    #allocation5 [shape = 's32[1]{0}', space=sflag, size = 0x4, scoped, tag = 'scoped memory for tpu_custom_call.1']
    #allocation6 [shape = 'u8[12288]{0}', space=vmem, size = 0x3000, scoped, tag = 'input window, operand 3, single buffered']
    #allocation7 [shape = 'u8[1536]{0}', space=vmem, size = 0x800, scoped, tag = 'output window, operand 0, single buffered']
    %9 = vsyncpa [#allocation5], 0
    %10 = vsyncpa [#allocation3], 0
    %11 = vsyncpa [#allocation4], 0
    // Predicated region
    $region2: #{tpu_custom_call.1} parent=1 // pred_check
      _
    $region3: #{tpu_custom_call.1} parent=1 // pred_check_branch
      %13 = sbr.rel (0) target = $region5
    $region4: #{tpu_custom_call.1} parent=1 // pred_region
      %15 = vsyncadd [#allocation5], 0
      %s17 = sshll.u32 %s0, 4
      %s18 = int_to_ptr.vmem [resolvable:$true] %s17
      %20 = dma.vmem_to_smem %s18, 16, [#allocation2], [#allocation5]
    $region5: #{tpu_custom_call.1} parent=1 // pred_fallthru
      _
    // Predicated region
    $region6: #{tpu_custom_call.1} parent=1 // pred_check
      _
    $region7: #{tpu_custom_call.1} parent=1 // pred_check_branch
      %22 = sbr.rel (0) target = $region9
    $region8: #{tpu_custom_call.1} parent=1 // pred_region
      _
    $region9: #{tpu_custom_call.1} parent=1 // pred_fallthru
      _
    // Predicated region
    $region10: #{tpu_custom_call.1} parent=1 // pred_check
      _
    $region11: #{tpu_custom_call.1} parent=1 // pred_check_branch
      %24 = sbr.rel (0) target = $region13
    $region12: #{tpu_custom_call.1} parent=1 // pred_region
      _
    $region13: #{tpu_custom_call.1} parent=1 // pred_fallthru
      _
    // Predicated region
    $region14: #{tpu_custom_call.1} parent=1 // pred_check
      _
    $region15: #{tpu_custom_call.1} parent=1 // pred_check_branch
      %26 = sbr.rel (0) target = $region17
    $region16: #{tpu_custom_call.1} parent=1 // pred_region
      %28 = vsyncadd [#allocation3], 0
      %s30 = sshll.u32 %s3, 4
      %s31 = int_to_ptr.hbm [resolvable:$true] %s30
      %s32 = sshll.u32 [#allocation6], 4
      %s33 = int_to_ptr.vmem [resolvable:$true] %s32
      %35 = dma.hbm_to_vmem [thread:$0]  %s31, 384, %s33, [#allocation3]
    $region17: #{tpu_custom_call.1} parent=1 // pred_fallthru
      _
    // Predicated region
    $region18: #{tpu_custom_call.1} parent=1 // pred_check
      _
    $region19: #{tpu_custom_call.1} parent=1 // pred_check_branch
      %37 = sbr.rel (0) target = $region21
    $region20: #{tpu_custom_call.1} parent=1 // pred_region
      %39 = dma.done [#allocation5], 16
    $region21: #{tpu_custom_call.1} parent=1 // pred_fallthru
      _
    // Predicated region
    $region22: #{tpu_custom_call.1} parent=1 // pred_check
      _
    $region23: #{tpu_custom_call.1} parent=1 // pred_check_branch
      %41 = sbr.rel (0) target = $region25
    $region24: #{tpu_custom_call.1} parent=1 // pred_region
      %43 = dma.done [#allocation3], 384
    $region25: #{tpu_custom_call.1} parent=1 // pred_fallthru
      _
    %44 = sfence
    %v45 = vld [vmem:[#allocation6] sm:$0x3f]
    %v46 = vld [vmem:[#allocation6 + $0x8] sm:$0x3f]
    %v47 = vld [vmem:[#allocation6 + $0x10] sm:$0x3f]
    %v48 = vld [vmem:[%s1] sm:$0x3f]
    %50 = vset.pattern.permute.xlu0 0
    %51 = vperm.xlu0 %50, %v48
    %v52 = vpop.permute.xlu0 %51
    %v54 = vsub.f32 %v45, %v52
    %v55 = vsub.f32 %v46, %v52
    %v56 = vsub.f32 %v47, %v52
    %v57 = vxor.u32 %v54, 2147483648
    %v58 = vxor.u32 %v55, 2147483648
    %v59 = vxor.u32 %v56, 2147483648
    %v60 = vmul.f32 %v57, 1.442695
    %v61 = vpow.pop %v60
    %v62 = vmul.f32 %v58, 1.442695
    %v63 = vpow.pop %v62
    %v64 = vmul.f32 %v59, 1.442695
    %v65 = vpow.pop %v64
    %v66 = vadd.f32 %v61, 1.0
    %v67 = vadd.f32 %v63, 1.0
    %v68 = vadd.f32 %v65, 1.0
    %v69 = vrcp.pop %v66
    %v70 = vmul.f32 %v66, %v69
    %v71 = vsub.f32 1.0, %v70
    %v72 = vmul.f32 %v69, %v71
    %v73 = vadd.f32 %v69, %v72
    %vm74 = vweird.f32 %v66
    %vm75 = vweird.f32 %v69
    %vm76 = vmor %vm74, %vm75
    %v77 = vsel %vm76, %v69, %v73
    %v78 = vand.u32 2147483647, %v66
    %vm79 = vcmp.eq.f32.partialorder %v78, 8.507059e+37
    %v80 = vand.u32 %v66, 2147483648
    %v81 = vor.u32 1.1754944e-38, %v80
    %v82 = vsel %vm79, %v81, %v77
    %v83 = vmul.f32 1.0, %v82
    %v84 = vrcp.pop %v67
    %v85 = vmul.f32 %v67, %v84
    %v86 = vsub.f32 1.0, %v85
    %v87 = vmul.f32 %v84, %v86
    %v88 = vadd.f32 %v84, %v87
    %vm89 = vweird.f32 %v67
    %vm90 = vweird.f32 %v84
    %vm91 = vmor %vm89, %vm90
    %v92 = vsel %vm91, %v84, %v88
    %v93 = vand.u32 2147483647, %v67
    %vm94 = vcmp.eq.f32.partialorder %v93, 8.507059e+37
    %v95 = vand.u32 %v67, 2147483648
    %v96 = vor.u32 1.1754944e-38, %v95
    %v97 = vsel %vm94, %v96, %v92
    %v98 = vmul.f32 1.0, %v97
    %v99 = vrcp.pop %v68
    %v100 = vmul.f32 %v68, %v99
    %v101 = vsub.f32 1.0, %v100
    %v102 = vmul.f32 %v99, %v101
    %v103 = vadd.f32 %v99, %v102
    %vm104 = vweird.f32 %v68
    %vm105 = vweird.f32 %v99
    %vm106 = vmor %vm104, %vm105
    %v107 = vsel %vm106, %v99, %v103
    %v108 = vand.u32 2147483647, %v68
    %vm109 = vcmp.eq.f32.partialorder %v108, 8.507059e+37
    %v110 = vand.u32 %v68, 2147483648
    %v111 = vor.u32 1.1754944e-38, %v110
    %v112 = vsel %vm109, %v111, %v107
    %v113 = vmul.f32 1.0, %v112
    %v114 = vmul.f32 %v45, %v83
    %v115 = vmul.f32 %v46, %v98
    %v116 = vmul.f32 %v47, %v113
    %v117 = vld [vmem:[%s2] sm:$0x3f]
    %119 = vset.pattern.permute.xlu0 0
    %120 = vperm.xlu0 %119, %v117
    %v121 = vpop.permute.xlu0 %120
    %v123 = vmul.f32 %v121, %v114
    %v124 = vmul.f32 %v121, %v115
    %v125 = vmul.f32 %v121, %v116
    %vm126 = vcmask 1045504
    %v127 = vsel %vm126, %v123, 0.0
    %v128 = vrot.slane %v127, 4
    %v129 = vadd.f32 %v127, %v128
    %v130 = vrot.slane %v129, 2
    %v131 = vadd.f32 %v129, %v130
    %v132 = vrot.slane %v131, 1
    %v133 = vadd.f32 %v131, %v132
    %v134 = vsel %vm126, %v124, 0.0
    %v135 = vrot.slane %v134, 4
    %v136 = vadd.f32 %v134, %v135
    %v137 = vrot.slane %v136, 2
    %v138 = vadd.f32 %v136, %v137
    %v139 = vrot.slane %v138, 1
    %v140 = vadd.f32 %v138, %v139
    %v141 = vsel %vm126, %v125, 0.0
    %v142 = vrot.slane %v141, 4
    %v143 = vadd.f32 %v141, %v142
    %v144 = vrot.slane %v143, 2
    %v145 = vadd.f32 %v143, %v144
    %v146 = vrot.slane %v145, 1
    %v147 = vadd.f32 %v145, %v146
    %s148 = sld [smem:[#allocation2]]
    %v149 = vstv %s148
    %v150 = vadd.f32 %v149, %v133
    %v151 = vadd.f32 %v149, %v140
    %v152 = vadd.f32 %v149, %v147
    %v153 = vmax.f32 %v150, 0.0
    %v154 = vmax.f32 %v151, 0.0
    %v155 = vmax.f32 %v152, 0.0
    %v156 = vmin.f32 %v153, 1.0
    %v157 = vmin.f32 %v154, 1.0
    %v158 = vmin.f32 %v155, 1.0
    %s159 = scalar_lea.vmem [#allocation6], 5
    %v160 = vld [vmem:[%s159] ss:$8 sm:$0x7]
    %s161 = sld [smem:[#allocation2 + $0x1]]
    %s162 = sld [smem:[#allocation2 + $0x2]]
    %v163 = vstv %s162
    %v164 = vmul.f32 %v163, %v160
    %v165 = vstv %s161
    %v166 = vadd.f32 %v165, %v164
    %s167 = sld [smem:[#allocation2 + $0x3]]
    %v168 = vstv %s167
    %v169 = vmul.f32 %v168, %v156
    %v170 = vmul.f32 %v168, %v157
    %v171 = vmul.f32 %v168, %v158
    %v175 = vrot.slane %v170, 7
    %v176 = vrot.slane %v171, 6
    %vm177 = vcmask 1040384
    %v178 = vsel %vm177, %v169, %v175
    %vm179 = vcmask 1041408
    %v180 = vsel %vm179, %v178, %v176
    %v182 = vadd.f32 %v166, %v180
    %s183 = sld [smem:[#allocation2 + $0x4]]
    %v184 = vstv %s183
    %v185 = vmul.f32 %v184, %v114
    %v186 = vmul.f32 %v184, %v115
    %v187 = vmul.f32 %v184, %v116
    %191 = vst [vmem:[#allocation1] sm:$0xff] %v185
    %192 = vst [vmem:[#allocation1 + $0x9] sm:$0xff] %v186
    %193 = vst [vmem:[#allocation1 + $0x12] sm:$0xff] %v187
    %s194 = scalar_lea.vmem [#allocation1], 4
    %v195 = vld [vmem:[%s194] ss:$9 sm:$0xff]
    %v197 = vadd.f32 %v182, %v195
    %v198 = vmax.f32 %v197, 0.0
    %v199 = vmin.f32 %v198, 1.0
    %v200 = vlaneseq
    %vm201 = vcmp.ge.s32.totalorder %v200, 0
    %vm202 = vcmp.lt.s32.totalorder %v200, 384
    %vm203 = vmand %vm201, %vm202
    %204 = vst.msk [vmem:[#allocation7] sm:$0x7] %vm203, %v199
    // Predicated region
    $region26: #{tpu_custom_call.1} parent=1 // pred_check
      _
    $region27: #{tpu_custom_call.1} parent=1 // pred_check_branch
      %206 = sbr.rel (0) target = $region29
    $region28: #{tpu_custom_call.1} parent=1 // pred_region
      %208 = vsyncadd [#allocation4], 0
      %s210 = sshll.u32 [#allocation7], 4
      %s211 = int_to_ptr.vmem [resolvable:$true] %s210
      %s212 = sshll.u32 %s4, 4
      %s213 = int_to_ptr.hbm [resolvable:$true] %s212
      %215 = dma.vmem_to_hbm [thread:$0]  %s211, 48, %s213, [#allocation4]
    $region29: #{tpu_custom_call.1} parent=1 // pred_fallthru
      _
    // Predicated region
    $region30: #{tpu_custom_call.1} parent=1 // pred_check
      _
    $region31: #{tpu_custom_call.1} parent=1 // pred_check_branch
      %217 = sbr.rel (0) target = $region33
    $region32: #{tpu_custom_call.1} parent=1 // pred_region
      %219 = dma.done [#allocation4], 48
    $region33: #{tpu_custom_call.1} parent=1 // pred_fallthru
      _
    %220 = vsyncpa [#allocation3], 1
    %221 = vsyncpa [#allocation4], 1
    %222 = vsyncpa [#allocation5], 1

</llo_original>
